<compile_context>
chip_gen: v6e
topology: v6e:2x2x1
jax: 0.10.0
libtpu: 0.0.40
codegen_flags: <defaults>
</compile_context>

<pallas_src>
import functools
import math

import jax
import jax.numpy as jnp
from jax import lax
from jax.experimental import pallas as pl
from jax.experimental.pallas import tpu as pltpu


D_MODEL = 512      # matches the reference script's d_model
DROPOUT_P = 0.1
MAX_LEN = 5000


# ------------------------ "module init": pe buffer ---------------------------
def make_pe_table(d_model, max_len=MAX_LEN, dtype=jnp.float32):
    """Equivalent of the buffer built in PositionalEncoding.__init__: (max_len, d_model)."""
    position = jnp.arange(max_len, dtype=jnp.float32)[:, None]               # (max_len, 1)
    div_term = jnp.exp(jnp.arange(0, d_model, 2, dtype=jnp.float32)
                       * (-math.log(10000.0) / d_model))                     # (d_model//2,)
    angles = position * div_term                                             # (max_len, d_model//2)
    pe = jnp.zeros((max_len, d_model), jnp.float32)
    pe = pe.at[:, 0::2].set(jnp.sin(angles))
    pe = pe.at[:, 1::2].set(jnp.cos(angles))
    return pe.astype(dtype)


# ------------------------------- kernel ---------------------------------------
def _pe_kernel(*refs, seq_len, d_model, tb, ts, p, train):
    # train=True : refs = (seed_ref[SMEM], x_ref, pe_ref, o_ref)
    # train=False: refs = (x_ref, pe_ref, o_ref)
    if train:
        seed_ref, x_ref, pe_ref, o_ref = refs
    else:
        x_ref, pe_ref, o_ref = refs

    y = x_ref[...] + pe_ref[...][None, :, :]          # (tb, ts, D) + (ts, D)

    if train and p > 0.0:                              # static Python branch
        if p >= 1.0:
            y = jnp.zeros_like(y)
        else:
            # Counter-based hash PRNG: hash(global element index ^ seed).
            # Works in both Mosaic and interpret mode (no pltpu.prng_* needed)
            # and gives identical masks regardless of tiling.
            seed = seed_ref[0].astype(jnp.uint32)
            s_off = pl.program_id(0) * ts              # seq axis is grid dim 0
            b_off = pl.program_id(1) * tb              # batch axis is grid dim 1
            shape = y.shape
            bi = lax.broadcasted_iota(jnp.int32, shape, 0) + b_off
            si = lax.broadcasted_iota(jnp.int32, shape, 1) + s_off
            di = lax.broadcasted_iota(jnp.int32, shape, 2)
            lin = (bi * seq_len + si) * d_model + di   # wrap-around OK for hashing
            z = lin.astype(jnp.uint32) ^ (seed * jnp.uint32(0x9E3779B9))
            z = z + jnp.uint32(0x7F4A7C15)
            # "lowbias32" finalizer (good avalanche, cheap VPU integer ops)
            z = z ^ (z >> 16)
            z = z * jnp.uint32(0x7FEB352D)
            z = z ^ (z >> 15)
            z = z * jnp.uint32(0x846CA68B)
            z = z ^ (z >> 16)
            # drop iff z < p * 2^32 (clamped so p near 1.0 doesn't wrap to 0)
            threshold = jnp.uint32(min(int(round(p * 4294967296.0)), 0xFFFFFFFF))
            keep = z >= threshold
            y = jnp.where(keep, y * (1.0 / (1.0 - p)), 0.0)

    o_ref[...] = y.astype(o_ref.dtype)


# --------------------------- tile selection ------------------------------------
def _choose_tiles(B, S, D, itemsize, budget_bytes=2 << 20):
    """Pick (tb, ts) so each x/out block is ~<= budget_bytes and (8,128) legal."""
    if S < 8:
        ts = S                                   # full-extent block (always legal)
    else:
        ts = 256                                 # multiple of 8
        while ts > 8 and ts > S:
            ts //= 2
        while ts > 8 and ts * D * itemsize > budget_bytes:
            ts //= 2
        ts = max(ts, 8)
    row_bytes = max(ts * D * itemsize, 1)
    tb = max(1, min(B, budget_bytes // row_bytes))
    return tb, ts


# ------------------------------ forward ---------------------------------------
def positional_encoding_forward(x, pe, *, p=DROPOUT_P, train=False, seed=0,
                                donate_x=False):
    """x: (B, S, D); pe: (max_len, D) buffer. Returns x + pe[:S] (+ dropout if train)."""
    B, S, D = x.shape
    assert pe.shape[1] == D and pe.shape[0] >= S
    if pe.dtype != x.dtype:                     # keep the add memory-bound in x's dtype
        pe = pe.astype(x.dtype)

    tb, ts = _choose_tiles(B, S, D, x.dtype.itemsize)
    grid = (pl.cdiv(S, ts), pl.cdiv(B, tb))     # seq outermost -> pe block stays resident
    out_shape = jax.ShapeDtypeStruct((B, S, D), x.dtype)
    cparams = pltpu.CompilerParams(dimension_semantics=("parallel", "parallel"))

    use_dropout = bool(train) and float(p) > 0.0

    if use_dropout:
        kernel = functools.partial(_pe_kernel, seq_len=S, d_model=D, tb=tb, ts=ts,
                                   p=float(p), train=True)
        seed_arr = jnp.asarray([seed], dtype=jnp.int32)
        aliases = {1: 0} if donate_x else {}
        return pl.pallas_call(
            kernel,
            out_shape=out_shape,
            grid_spec=pltpu.PrefetchScalarGridSpec(
                num_scalar_prefetch=1,           # dropout seed lives in SMEM
                grid=grid,
                in_specs=[
                    pl.BlockSpec((tb, ts, D), lambda s, b, seed: (b, s, 0)),   # x
                    pl.BlockSpec((ts, D), lambda s, b, seed: (s, 0)),          # pe window
                ],
                out_specs=pl.BlockSpec((tb, ts, D), lambda s, b, seed: (b, s, 0)),
            ),
            compiler_params=cparams,
            input_output_aliases=aliases,
        )(seed_arr, x, pe)

    # eval / p==0 path: no seed plumbing at all
    kernel = functools.partial(_pe_kernel, seq_len=S, d_model=D, tb=tb, ts=ts,
                               p=0.0, train=False)
    aliases = {0: 0} if donate_x else {}
    return pl.pallas_call(
        kernel,
        out_shape=out_shape,
        grid=grid,
        in_specs=[
            pl.BlockSpec((tb, ts, D), lambda s, b: (b, s, 0)),                 # x
            pl.BlockSpec((ts, D), lambda s, b: (s, 0)),                        # pe window
        ],
        out_specs=pl.BlockSpec((tb, ts, D), lambda s, b: (b, s, 0)),
        compiler_params=cparams,
        input_output_aliases=aliases,
    )(x, pe)


# -------------------------------- main -----------------------------------------
if __name__ == "__main__":
    B, S = 2, 8
    key = jax.random.PRNGKey(0)
    x = jax.random.normal(key, (B, S, D_MODEL), jnp.float32)

    pe = make_pe_table(D_MODEL, max_len=MAX_LEN)   # buffer built once, like __init__

    # ---- eval mode (dropout = identity), checked against the exact reference ----
    out = jax.block_until_ready(positional_encoding_forward(x, pe, train=False))
    ref = x + pe[None, :S, :]
    assert out.shape == (B, S, D_MODEL), out.shape
    assert bool(jnp.all(jnp.isfinite(out)))
    assert bool(jnp.allclose(out, ref, atol=1e-6, rtol=1e-6))

    # ---- train mode (inverted dropout) semantics check ----
    out_tr = jax.block_until_ready(
        positional_encoding_forward(x, pe, p=DROPOUT_P, train=True, seed=123))
    assert out_tr.shape == (B, S, D_MODEL)
    assert bool(jnp.all(jnp.isfinite(out_tr)))
    kept = out_tr != 0.0
    scale = 1.0 / (1.0 - DROPOUT_P)
    # kept elements equal (x + pe) / (1 - p); dropped elements are exactly 0
    assert bool(jnp.allclose(jnp.where(kept, out_tr, 0.0),
                             jnp.where(kept, ref * scale, 0.0),
                             atol=1e-5, rtol=1e-5))
    frac_drop = 1.0 - float(jnp.mean(kept.astype(jnp.float32)))
    assert 0.02 < frac_drop < 0.30, frac_drop    # ~0.1 expected; loose bounds

    print("KERNEL_OK")
</pallas_src>

<mosaic_0001>
module attributes {stable_mosaic.version = 11 : i64} {
  func.func @_pe_kernel(%arg0: i32, %arg1: i32, %arg2: memref<2x8x512xf32, #tpu.memory_space<vmem>>, %arg3: memref<8x512xf32, #tpu.memory_space<vmem>>, %arg4: memref<2x8x512xf32, #tpu.memory_space<vmem>>) attributes {dimension_semantics = [#tpu.dimension_semantics<parallel>, #tpu.dimension_semantics<parallel>], iteration_bounds = array<i64: 1, 1>, scalar_prefetch = 0 : i64, scratch_operands = 0 : i64, tpu.core_type = #tpu.core_type<tc>, window_params = [{transform_indices = @transform_0, window_bounds = array<i64: 2, 8, 512>}, {transform_indices = @transform_1, window_bounds = array<i64: 8, 512>}, {transform_indices = @transform_2, window_bounds = array<i64: 2, 8, 512>}]} {
    %c0 = arith.constant 0 : index
    %c0_0 = arith.constant 0 : index
    %c0_1 = arith.constant 0 : index
    %0 = vector.load %arg2[%c0, %c0_0, %c0_1] : memref<2x8x512xf32, #tpu.memory_space<vmem>>, vector<2x8x512xf32>
    %c0_2 = arith.constant 0 : index
    %c0_3 = arith.constant 0 : index
    %1 = vector.load %arg3[%c0_2, %c0_3] : memref<8x512xf32, #tpu.memory_space<vmem>>, vector<8x512xf32>
    %2 = vector.shape_cast %1 : vector<8x512xf32> to vector<1x8x512xf32>
    %3 = vector.broadcast %2 : vector<1x8x512xf32> to vector<2x8x512xf32>
    %4 = arith.addf %0, %3 : vector<2x8x512xf32>
    %c0_4 = arith.constant 0 : index
    %c0_5 = arith.constant 0 : index
    %c0_6 = arith.constant 0 : index
    %5 = vector.load %arg4[%c0_4, %c0_5, %c0_6] : memref<2x8x512xf32, #tpu.memory_space<vmem>>, vector<2x8x512xf32>
    tpu.vector_store %arg4[%c0_4, %c0_5, %c0_6], %4 {strides = array<i32>} : memref<2x8x512xf32, #tpu.memory_space<vmem>>, vector<2x8x512xf32>,
    return
  }
  func.func @transform_0(%arg0: i32, %arg1: i32) -> (i32, i32, i32) {
    %c0_i32 = arith.constant 0 : i32
    %c0_i32_0 = arith.constant 0 : i32
    return %arg1, %arg0, %c0_i32 : i32, i32, i32
  }
  func.func @transform_1(%arg0: i32, %arg1: i32) -> (i32, i32) {
    %c0_i32 = arith.constant 0 : i32
    %c0_i32_0 = arith.constant 0 : i32
    return %arg0, %c0_i32 : i32, i32
  }
  func.func @transform_2(%arg0: i32, %arg1: i32) -> (i32, i32, i32) {
    %c0_i32 = arith.constant 0 : i32
    %c0_i32_0 = arith.constant 0 : i32
    return %arg1, %arg0, %c0_i32 : i32, i32, i32
  }
}

</mosaic_0001>

<llo_original>
// kernel: tpu_custom_call.1
$region0: #{tpu_custom_call.1}
  #allocation0 [shape = 'u32[]', space=smem, size = 0x4, offset = 0x4, fixed_abs, tag = 'smem constant byte address 0x4 - core index']
  #allocation1 [shape = 'u32[144,128]{1,0:T(1,128)}', space=vmem, size = 0x12000, scoped, tag = 'internal scratch']
  %s0 = inlined_call_operand.hbm [shape: f32[2,8,512], index: 0, kind: input, shape index: {}]
  %s1 = inlined_call_operand.hbm [shape: f32[5000,512], index: 1, kind: input, shape index: {}]
  %s2 = inlined_call_operand.hbm [shape: f32[2,8,512], index: 2, kind: output, shape index: {}]
  %s3 = sld [smem:[#allocation0]]
  $region26: #{tpu_custom_call.1} parent=0
    _
  %s5 = ssub.s32 1, %s3
  %s6 = scalar_select 0, %s5, %s3
  $region1: #{tpu_custom_call.1} parent=0
    #allocation2 [shape = 'u8[32768]{0}', space=vmem, size = 0x8000, scoped, tag = 'input window, operand 0, single buffered']
    #allocation3 [shape = 's32[1]{0}', space=sflag, size = 0x4, scoped, tag = 'scoped memory for tpu_custom_call.1']
    #allocation4 [shape = 's32[1]{0}', space=sflag, size = 0x4, scoped, tag = 'scoped memory for tpu_custom_call.1']
    #allocation5 [shape = 'u8[16384]{0}', space=vmem, size = 0x4000, scoped, tag = 'input window, operand 1, single buffered']
    #allocation6 [shape = 's32[1]{0}', space=sflag, size = 0x4, scoped, tag = 'scoped memory for tpu_custom_call.1']
    #allocation7 [shape = 'u8[32768]{0}', space=vmem, size = 0x8000, scoped, tag = 'output window, operand 0, single buffered']
    %7 = vsyncpa [#allocation3], 0
    %8 = vsyncpa [#allocation6], 0
    %9 = vsyncpa [#allocation4], 0
    // Predicated region
    $region2: #{tpu_custom_call.1} parent=1 // pred_check
      _
    $region3: #{tpu_custom_call.1} parent=1 // pred_check_branch
      %11 = sbr.rel (0) target = $region5
    $region4: #{tpu_custom_call.1} parent=1 // pred_region
      %s13 = ssub.s32 1024, 1024
      %14 = vsyncadd [#allocation3], %s13
      %s15 = sshll.u32 [#allocation2], 4
      %s16 = int_to_ptr.vmem [resolvable:$true] %s15
      %21 = dma.hbm_to_vmem [thread:$0]  %s0, 1024, %s16, [#allocation3], 512, 512, 32
    $region5: #{tpu_custom_call.1} parent=1 // pred_fallthru
      _
    // Predicated region
    $region6: #{tpu_custom_call.1} parent=1 // pred_check
      _
    $region7: #{tpu_custom_call.1} parent=1 // pred_check_branch
      %23 = sbr.rel (0) target = $region9
    $region8: #{tpu_custom_call.1} parent=1 // pred_region
      %s25 = ssub.s32 512, 512
      %26 = vsyncadd [#allocation6], %s25
      %s28 = sshll.u32 [#allocation5], 4
      %s29 = int_to_ptr.vmem [resolvable:$true] %s28
      %31 = dma.hbm_to_vmem [thread:$0]  %s1, 512, %s29, [#allocation6]
    $region9: #{tpu_custom_call.1} parent=1 // pred_fallthru
      _
    // Predicated region
    $region10: #{tpu_custom_call.1} parent=1 // pred_check
      _
    $region11: #{tpu_custom_call.1} parent=1 // pred_check_branch
      %33 = sbr.rel (0) target = $region13
    $region12: #{tpu_custom_call.1} parent=1 // pred_region
      %34 = dma.done [#allocation3], 1024
    $region13: #{tpu_custom_call.1} parent=1 // pred_fallthru
      _
    // Predicated region
    $region14: #{tpu_custom_call.1} parent=1 // pred_check
      _
    $region15: #{tpu_custom_call.1} parent=1 // pred_check_branch
      %36 = sbr.rel (0) target = $region17
    $region16: #{tpu_custom_call.1} parent=1 // pred_region
      %37 = dma.done [#allocation6], 512
    $region17: #{tpu_custom_call.1} parent=1 // pred_fallthru
      _
    %v38 = vld [vmem:[#allocation2] sm:$0xff]
    %v39 = vld [vmem:[#allocation2 + $0x8] sm:$0xff]
    %v40 = vld [vmem:[#allocation2 + $0x10] sm:$0xff]
    %v41 = vld [vmem:[#allocation2 + $0x18] sm:$0xff]
    %v42 = vld [vmem:[#allocation2 + $0x20] sm:$0xff]
    %v43 = vld [vmem:[#allocation2 + $0x28] sm:$0xff]
    %v44 = vld [vmem:[#allocation2 + $0x30] sm:$0xff]
    %v45 = vld [vmem:[#allocation2 + $0x38] sm:$0xff]
    %v46 = vld [vmem:[#allocation5] sm:$0xff]
    %v47 = vld [vmem:[#allocation5 + $0x8] sm:$0xff]
    %v48 = vld [vmem:[#allocation5 + $0x10] sm:$0xff]
    %v49 = vld [vmem:[#allocation5 + $0x18] sm:$0xff]
    %v50 = vadd.f32 %v38, %v46
    %v51 = vadd.f32 %v39, %v47
    %v52 = vadd.f32 %v40, %v48
    %v53 = vadd.f32 %v41, %v49
    %v54 = vadd.f32 %v42, %v46
    %v55 = vadd.f32 %v43, %v47
    %v56 = vadd.f32 %v44, %v48
    %v57 = vadd.f32 %v45, %v49
    %58 = vst [vmem:[#allocation7] sm:$0xff] %v50
    %59 = vst [vmem:[#allocation7 + $0x8] sm:$0xff] %v51
    %60 = vst [vmem:[#allocation7 + $0x10] sm:$0xff] %v52
    %61 = vst [vmem:[#allocation7 + $0x18] sm:$0xff] %v53
    %62 = vst [vmem:[#allocation7 + $0x20] sm:$0xff] %v54
    %63 = vst [vmem:[#allocation7 + $0x28] sm:$0xff] %v55
    %64 = vst [vmem:[#allocation7 + $0x30] sm:$0xff] %v56
    %65 = vst [vmem:[#allocation7 + $0x38] sm:$0xff] %v57
    // Predicated region
    $region18: #{tpu_custom_call.1} parent=1 // pred_check
      _
    $region19: #{tpu_custom_call.1} parent=1 // pred_check_branch
      %67 = sbr.rel (0) target = $region21
    $region20: #{tpu_custom_call.1} parent=1 // pred_region
      %s69 = ssub.s32 1024, 1024
      %70 = vsyncadd [#allocation4], %s69
      %s71 = sshll.u32 [#allocation7], 4
      %s72 = int_to_ptr.vmem [resolvable:$true] %s71
      %77 = dma.vmem_to_hbm [thread:$0]  %s72, 1024, %s2, [#allocation4], 512, 512, 32
    $region21: #{tpu_custom_call.1} parent=1 // pred_fallthru
      _
    // Predicated region
    $region22: #{tpu_custom_call.1} parent=1 // pred_check
      _
    $region23: #{tpu_custom_call.1} parent=1 // pred_check_branch
      %79 = sbr.rel (0) target = $region25
    $region24: #{tpu_custom_call.1} parent=1 // pred_region
      %80 = dma.done [#allocation4], 1024
    $region25: #{tpu_custom_call.1} parent=1 // pred_fallthru
      _
    %81 = vsyncpa [#allocation3], 1
    %82 = vsyncpa [#allocation6], 1
    %83 = vsyncpa [#allocation4], 1

</llo_original>
